<compile_context>
chip_gen: v6e
topology: v6e:2x2x1
jax: 0.10.0
libtpu: 0.0.40
codegen_flags: <defaults>
</compile_context>

<pallas_src>
import functools
import math

import jax
import jax.numpy as jnp
from jax.experimental import pallas as pl
from jax.experimental.pallas import tpu as pltpu

_LANE = 128
_VMEM_LIMIT = 24 * 1024 * 1024  # conservative for v7x's smaller VMEM


def _round_up(v, m):
    return (v + m - 1) // m * m


def _pad2d(a, rows, cols):
    return jnp.pad(a, ((0, rows - a.shape[0]), (0, cols - a.shape[1])))


# --------------------------------------------------------------------------
# Kernel 1: support = x @ W      (node-row tiled, weights resident)
# --------------------------------------------------------------------------
def _support_kernel(x_ref, w_ref, o_ref):
    o_ref[...] = jnp.dot(
        x_ref[...], w_ref[...], preferred_element_type=jnp.float32
    ).astype(o_ref.dtype)


def _support_matmul(x_bf16, w_bf16, tile):
    n_pad, fp = x_bf16.shape
    hp = w_bf16.shape[1]
    return pl.pallas_call(
        _support_kernel,
        out_shape=jax.ShapeDtypeStruct((n_pad, hp), jnp.bfloat16),
        grid_spec=pltpu.PrefetchScalarGridSpec(
            num_scalar_prefetch=0,
            grid=(n_pad // tile,),
            in_specs=[
                pl.BlockSpec((tile, fp), lambda i: (i, 0)),
                pl.BlockSpec((fp, hp), lambda i: (0, 0)),
            ],
            out_specs=pl.BlockSpec((tile, hp), lambda i: (i, 0)),
        ),
        compiler_params=pltpu.CompilerParams(
            dimension_semantics=("parallel",),
            vmem_limit_bytes=_VMEM_LIMIT,
        ),
    )(x_bf16, w_bf16)


# --------------------------------------------------------------------------
# Kernel 2: out = (relu)(adj @ support + b), tiled over (rows, contraction)
# --------------------------------------------------------------------------
def _aggregate_kernel(adj_ref, sup_ref, b_ref, o_ref, acc_ref, *, apply_relu):
    k = pl.program_id(1)

    @pl.when(k == 0)
    def _():
        acc_ref[...] = jnp.zeros_like(acc_ref)

    acc_ref[...] += jnp.dot(
        adj_ref[...], sup_ref[...], preferred_element_type=jnp.float32
    )

    # Bias add + relu only once, on the final contraction step.
    @pl.when(k == pl.num_programs(1) - 1)
    def _():
        out = acc_ref[...] + b_ref[...]
        if apply_relu:
            out = jnp.maximum(out, 0.0)
        o_ref[...] = out.astype(o_ref.dtype)


def _aggregate(adj_bf16, sup_bf16, b_f32, tile, *, apply_relu, out_dtype):
    n_pad = adj_bf16.shape[0]
    hp = sup_bf16.shape[1]
    kernel = functools.partial(_aggregate_kernel, apply_relu=apply_relu)
    return pl.pallas_call(
        kernel,
        out_shape=jax.ShapeDtypeStruct((n_pad, hp), out_dtype),
        grid_spec=pltpu.PrefetchScalarGridSpec(
            num_scalar_prefetch=0,
            grid=(n_pad // tile, n_pad // tile),
            in_specs=[
                pl.BlockSpec((tile, tile), lambda i, k: (i, k)),  # adj
                pl.BlockSpec((tile, hp), lambda i, k: (k, 0)),    # support
                pl.BlockSpec((1, hp), lambda i, k: (0, 0)),       # bias
            ],
            out_specs=pl.BlockSpec((tile, hp), lambda i, k: (i, 0)),
            scratch_shapes=[pltpu.VMEM((tile, hp), jnp.float32)],
        ),
        compiler_params=pltpu.CompilerParams(
            dimension_semantics=("parallel", "arbitrary"),
            vmem_limit_bytes=_VMEM_LIMIT,
        ),
    )(adj_bf16, sup_bf16, b_f32)


# --------------------------------------------------------------------------
# Wrapper: full GCN forward
# --------------------------------------------------------------------------
def gcn_forward(x, adj, params, *, tile=None):
    """GCN.forward (inference; dropout off, batch_norm=False)."""
    n, f = x.shape
    nclass = params[-1][0].shape[1]

    n_pad = _round_up(n, _LANE)
    if tile is None:
        tile = 256 if n_pad % 256 == 0 else _LANE
    n_pad = _round_up(n_pad, tile)

    adj_b = _pad2d(adj, n_pad, n_pad).astype(jnp.bfloat16)
    h = _pad2d(x, n_pad, _round_up(f, _LANE)).astype(jnp.bfloat16)

    n_layers = len(params)
    for li, (w, b) in enumerate(params):
        fin, fout = w.shape
        fp, hp = _round_up(fin, _LANE), _round_up(fout, _LANE)
        # (After padding, fp == hp here, so both matmul associations cost the
        # same; otherwise (adj @ x) @ W would be preferred when fp < hp.)
        w_p = _pad2d(w, fp, hp).astype(jnp.bfloat16)
        b_p = _pad2d(b, 1, hp).astype(jnp.float32)
        last = li == n_layers - 1

        sup = _support_matmul(h, w_p, tile)
        h = _aggregate(
            adj_b, sup, b_p, tile,
            apply_relu=not last,
            out_dtype=jnp.float32 if last else jnp.bfloat16,
        )
        # dropout: identity in eval mode.

    out = h[:n, :nclass]
    if nclass == 1:
        out = jnp.squeeze(out, axis=1)
    return out


def init_gcn_params(key, nfeat, nhid, nclass, n_layers=2):
    """Mirrors GraphConvolution.reset_parameters: U(-stdv, stdv),
    stdv = 1/sqrt(out_features)."""
    dims = [nfeat] + [nhid] * (n_layers - 1) + [nclass]
    params = []
    for i in range(n_layers):
        fin, fout = dims[i], dims[i + 1]
        stdv = 1.0 / math.sqrt(fout)
        key, kw, kb = jax.random.split(key, 3)
        w = jax.random.uniform(kw, (fin, fout), jnp.float32, -stdv, stdv)
        b = jax.random.uniform(kb, (1, fout), jnp.float32, -stdv, stdv)
        params.append((w, b))
    return params


def gcn_reference(x, adj, params, *, bf16_matmuls):
    """Pure-JAX reference. With bf16_matmuls=True it mirrors the kernel's
    precision (bf16 operands, f32 accumulation)."""
    if bf16_matmuls:
        lo = lambda a: a.astype(jnp.bfloat16)
    else:
        lo = lambda a: a
    adj_l = lo(adj)
    h = lo(x)
    n_layers = len(params)
    out = None
    for i, (w, b) in enumerate(params):
        sup = lo(jnp.dot(h, lo(w), preferred_element_type=jnp.float32))
        out = jnp.dot(adj_l, sup, preferred_element_type=jnp.float32) + b
        if i < n_layers - 1:
            h = lo(jnp.maximum(out, 0.0))
    if out.shape[1] == 1:
        out = jnp.squeeze(out, axis=1)
    return out


if __name__ == "__main__":
    # Small, module-consistent shapes: N nodes (non-multiple of 128 to
    # exercise padding), nfeat -> nhid -> nclass.
    N, nfeat, nhid, nclass, n_layers = 500, 32, 64, 8, 2

    key = jax.random.PRNGKey(0)
    kx, ka, kp = jax.random.split(key, 3)

    x = jax.random.normal(kx, (N, nfeat), jnp.float32)

    # Dense "normalized adjacency" built in-script (symmetric, row-normalized).
    a = (jax.random.uniform(ka, (N, N)) < 0.05).astype(jnp.float32)
    a = jnp.maximum(a, a.T) + jnp.eye(N, dtype=jnp.float32)
    deg = jnp.sum(a, axis=1, keepdims=True)
    adj = a / deg

    params = init_gcn_params(kp, nfeat, nhid, nclass, n_layers)

    out = gcn_forward(x, adj, params)
    out = jax.block_until_ready(out)

    assert out.shape == (N, nclass)

    # Tight check vs a precision-matched (bf16-operand) reference.
    ref_bf16 = gcn_reference(x, adj, params, bf16_matmuls=True)
    assert jnp.allclose(out, ref_bf16, atol=2e-3, rtol=2e-3)

    # Loose sanity check vs the full-f32 reference.
    ref_f32 = gcn_reference(x, adj, params, bf16_matmuls=False)
    assert jnp.allclose(out, ref_f32, atol=5e-2, rtol=5e-2)

    print("KERNEL_OK")
</pallas_src>

<mosaic_0001>
module attributes {stable_mosaic.version = 11 : i64} {
  func.func @_support_kernel(%arg0: i32, %arg1: memref<256x128xbf16, #tpu.memory_space<vmem>>, %arg2: memref<128x128xbf16, #tpu.memory_space<vmem>>, %arg3: memref<256x128xbf16, #tpu.memory_space<vmem>>) attributes {dimension_semantics = [#tpu.dimension_semantics<parallel>], iteration_bounds = array<i64: 2>, scalar_prefetch = 0 : i64, scratch_operands = 0 : i64, tpu.core_type = #tpu.core_type<tc>, window_params = [{transform_indices = @transform_0, window_bounds = array<i64: 256, 128>}, {pipeline_mode = #tpu.pipeline_mode<synchronous>, transform_indices = @transform_1, window_bounds = array<i64: 128, 128>}, {transform_indices = @transform_2, window_bounds = array<i64: 256, 128>}]} {
    %c0 = arith.constant 0 : index
    %c0_0 = arith.constant 0 : index
    %0 = vector.load %arg1[%c0, %c0_0] : memref<256x128xbf16, #tpu.memory_space<vmem>>, vector<256x128xbf16>
    %c0_1 = arith.constant 0 : index
    %c0_2 = arith.constant 0 : index
    %1 = vector.load %arg2[%c0_1, %c0_2] : memref<128x128xbf16, #tpu.memory_space<vmem>>, vector<128x128xbf16>
    %cst = arith.constant dense<0.000000e+00> : vector<256x128xf32>
    %2 = tpu.matmul %0, %1, %cst {dimension_numbers = #tpu.dot_dimension_numbers<[1], [0], [0], [1], [0, 0, 1, 1], [], []>} : vector<256x128xbf16>, vector<128x128xbf16>, vector<256x128xf32> -> vector<256x128xf32>
    %3 = arith.truncf %2 : vector<256x128xf32> to vector<256x128xbf16>
    %c0_3 = arith.constant 0 : index
    %c0_4 = arith.constant 0 : index
    %4 = vector.load %arg3[%c0_3, %c0_4] : memref<256x128xbf16, #tpu.memory_space<vmem>>, vector<256x128xbf16>
    tpu.vector_store %arg3[%c0_3, %c0_4], %3 {strides = array<i32>} : memref<256x128xbf16, #tpu.memory_space<vmem>>, vector<256x128xbf16>,
    return
  }
  func.func @transform_0(%arg0: i32) -> (i32, i32) {
    %c0_i32 = arith.constant 0 : i32
    %c0_i32_0 = arith.constant 0 : i32
    return %arg0, %c0_i32 : i32, i32
  }
  func.func @transform_1(%arg0: i32) -> (i32, i32) {
    %c0_i32 = arith.constant 0 : i32
    %c0_i32_0 = arith.constant 0 : i32
    %c0_i32_1 = arith.constant 0 : i32
    return %c0_i32, %c0_i32_0 : i32, i32
  }
  func.func @transform_2(%arg0: i32) -> (i32, i32) {
    %c0_i32 = arith.constant 0 : i32
    %c0_i32_0 = arith.constant 0 : i32
    return %arg0, %c0_i32 : i32, i32
  }
}

</mosaic_0001>

<llo_original>
// kernel: tpu_custom_call.1
$region0: #{tpu_custom_call.1}
  #allocation0 [shape = 'u32[]', space=smem, size = 0x4, offset = 0x4, fixed_abs, tag = 'smem constant byte address 0x4 - core index']
  #allocation1 [shape = 'u32[144,128]{1,0:T(1,128)}', space=vmem, size = 0x12000, scoped, tag = 'internal scratch']
  %s0 = inlined_call_operand.hbm [shape: bf16[512,128], index: 0, kind: input, shape index: {}]
  %s1 = inlined_call_operand.hbm [shape: bf16[128,128], index: 1, kind: input, shape index: {}]
  %s2 = inlined_call_operand.hbm [shape: bf16[512,128], index: 2, kind: output, shape index: {}]
  %s3 = sld [smem:[#allocation0]]
  $region49: #{tpu_custom_call.1} parent=0
    _
  %s5 = ssub.s32 1, %s3
  %s6 = scalar_select 0, %s5, %s3
  $region1: #{tpu_custom_call.1} parent=0
    #allocation2 [shape = 'u8[131072]{0}', space=vmem, size = 0x20000, scoped, tag = 'input window, operand 0']
    #allocation3 [shape = 's32[2]{0}', space=sflag, size = 0x8, scoped, tag = 'scoped memory for tpu_custom_call.1']
    #allocation4 [shape = 's32[2]{0}', space=sflag, size = 0x8, scoped, tag = 'scoped memory for tpu_custom_call.1']
    #allocation5 [shape = 'u8[32768]{0}', space=vmem, size = 0x8000, scoped, tag = 'input window, operand 1, single buffered']
    #allocation6 [shape = 's32[1]{0}', space=sflag, size = 0x4, scoped, tag = 'scoped memory for tpu_custom_call.1']
    #allocation7 [shape = 'u8[131072]{0}', space=vmem, size = 0x20000, scoped, tag = 'output window, operand 0']
    %7 = vsyncpa [#allocation3], 0
    %s8 = scalar_lea.sflag [#allocation3], 1
    %9 = vsyncpa %s8, 0
    %10 = vsyncpa [#allocation6], 0
    %11 = vsyncpa [#allocation4], 0
    %s12 = scalar_lea.sflag [#allocation4], 1
    %13 = vsyncpa %s12, 0
    loop: start=0, step=1, limit=4
    $region2: #{tpu_custom_call.1} parent=1 // loop_pre_header
      _
    $region3: #{tpu_custom_call.1} parent=1 // loop_header
      %s15 = sphi 0, %s19
      %p16 = scmp.ge.s32.totalorder %s15, 4
      %s25 = sphi 0, %s27
      %s28 = sphi 0, %s25
      %s29 = sphi 0, %s28
      %s45 = sphi 0, %s29
      %s49 = sphi 0, %s49
      %s51 = sphi 0, %s49
      %s52 = sphi 0, %s51
      %s66 = sphi 0, %s52
      %s72 = sphi 0, %s74
      %s75 = sphi 0, %s72
      %s76 = sphi 0, %s75
      %s92 = sphi 0, %s76
    $region4: #{tpu_custom_call.1} parent=1 // loop_header_branch
      %18 = sbr.rel (%p16) target = $region8
    $region5: #{tpu_custom_call.1} parent=1 // loop_body
      %s20 = ssub.s32 %s15, 1
      %s21 = ssub.s32 %s15, 2
      %s22 = sadd.s32 %s15, 1
      %s23 = ssub.s32 %s15, %s22
      %p24 = scmp.eq.s32.totalorder %s23, 0
      %s26 = sadd.s32 %s25, 1
      %s27 = scalar_select %p24, %s25, %s26
      %p30 = pneg %p24
      %p31 = scmp.eq.s32.totalorder %s15, 1
      %p32 = por %p30, %p31
      %p33 = scmp.ne.s32.totalorder %s25, %s28
      %p34 = scmp.eq.s32.totalorder %s15, 0
      %p35 = por %p33, %p34
      %p36 = scmp.ne.s32.totalorder %s25, %s28
      %p37 = scmp.eq.s32.totalorder %s20, 1
      %p38 = por %p36, %p37
      %p39 = scmp.ne.s32.totalorder %s28, %s29
      %p40 = scmp.eq.s32.totalorder %s20, 0
      %p41 = por %p39, %p40
      %p42 = scmp.ne.s32.totalorder %s28, %s29
      %p43 = scmp.eq.s32.totalorder %s21, 1
      %p44 = por %p42, %p43
      %p46 = scmp.ne.s32.totalorder %s29, %s45
      %p47 = scmp.eq.s32.totalorder %s21, 0
      %p48 = por %p46, %p47
      %s50 = sadd.s32 %s49, 1
      %p53 = scmp.eq.s32.totalorder %s15, 1
      %p54 = scmp.ne.s32.totalorder %s49, %s51
      %p55 = scmp.eq.s32.totalorder %s15, 0
      %p56 = por %p54, %p55
      %p57 = scmp.ne.s32.totalorder %s49, %s51
      %p58 = scmp.eq.s32.totalorder %s20, 1
      %p59 = por %p57, %p58
      %p60 = scmp.ne.s32.totalorder %s51, %s52
      %p61 = scmp.eq.s32.totalorder %s20, 0
      %p62 = por %p60, %p61
      %p63 = scmp.ne.s32.totalorder %s51, %s52
      %p64 = scmp.eq.s32.totalorder %s21, 1
      %p65 = por %p63, %p64
      %p67 = scmp.ne.s32.totalorder %s52, %s66
      %p68 = scmp.eq.s32.totalorder %s21, 0
      %p69 = por %p67, %p68
      %s70 = ssub.s32 %s15, %s22
      %p71 = scmp.eq.s32.totalorder %s70, 0
      %s73 = sadd.s32 %s72, 1
      %s74 = scalar_select %p71, %s72, %s73
      %p77 = pneg %p71
      %p78 = scmp.eq.s32.totalorder %s15, 1
      %p79 = por %p77, %p78
      %p80 = scmp.ne.s32.totalorder %s72, %s75
      %p81 = scmp.eq.s32.totalorder %s15, 0
      %p82 = por %p80, %p81
      %p83 = scmp.ne.s32.totalorder %s72, %s75
      %p84 = scmp.eq.s32.totalorder %s20, 1
      %p85 = por %p83, %p84
      %p86 = scmp.ne.s32.totalorder %s75, %s76
      %p87 = scmp.eq.s32.totalorder %s20, 0
      %p88 = por %p86, %p87
      %p89 = scmp.ne.s32.totalorder %s75, %s76
      %p90 = scmp.eq.s32.totalorder %s21, 1
      %p91 = por %p89, %p90
      %p93 = scmp.ne.s32.totalorder %s76, %s92
      %p94 = scmp.eq.s32.totalorder %s21, 0
      %p95 = por %p93, %p94
      %p96 = scmp.le.s32.totalorder 1, %s15
      %p97 = scmp.lt.s32.totalorder %s15, 3
      %p98 = pnand %p96, %p97
      %p99 = pneg %p98
      // Predicated region
      $region9: #{tpu_custom_call.1} parent=5 // pred_check
        _
      $region10: #{tpu_custom_call.1} parent=5 // pred_check_branch
        %101 = sbr.rel (%p98) target = $region12
      $region11: #{tpu_custom_call.1} parent=5 // pred_region
        %s102 = ssub.s32 %s15, 1
        // Predicated region
        $region13: #{tpu_custom_call.1} parent=11 // pred_check
          %p103 = pneg %p62
        $region14: #{tpu_custom_call.1} parent=11 // pred_check_branch
          %105 = sbr.rel (%p103) target = $region16
        $region15: #{tpu_custom_call.1} parent=11 // pred_region
          %s107 = ssub.s32 1024, 1024
          %108 = vsyncadd [#allocation6], %s107
          %s109 = sshll.u32 [#allocation5], 4
          %s110 = int_to_ptr.vmem [resolvable:$true] %s109
          %115 = dma.hbm_to_vmem [thread:$0]  %s1, 1024, %s110, [#allocation6], 64, 64, 4
        $region16: #{tpu_custom_call.1} parent=11 // pred_fallthru
          _
      $region12: #{tpu_custom_call.1} parent=5 // pred_fallthru
        _
      %p116 = scmp.lt.s32.totalorder %s15, 2
      // Predicated region
      $region17: #{tpu_custom_call.1} parent=5 // pred_check
        %p117 = pneg %p116
      $region18: #{tpu_custom_call.1} parent=5 // pred_check_branch
        %119 = sbr.rel (%p117) target = $region20
      $region19: #{tpu_custom_call.1} parent=5 // pred_region
        // Predicated region
        $region21: #{tpu_custom_call.1} parent=19 // pred_check
          %p120 = pneg %p35
        $region22: #{tpu_custom_call.1} parent=19 // pred_check_branch
          %122 = sbr.rel (%p120) target = $region24
        $region23: #{tpu_custom_call.1} parent=19 // pred_region
          %s123 = sand.u32 %s25, 1
          %s124 = scalar_lea.sflag [#allocation3], %s123
          %s125 = sand.u32 %s25, 1
          %s126 = smul.addr %s125, 128
          %s127 = scalar_lea.vmem [#allocation2], %s126
          %s128 = smul.u32 32, %s15
          %s130 = ssub.s32 2048, 2048
          %131 = vsyncadd %s124, %s130
          %s132 = smul.addr %s128, 64
          %s133 = scalar_lea.hbm %s0, %s132
          %s134 = sshll.u32 %s127, 4
          %s135 = int_to_ptr.vmem [resolvable:$true] %s134
          %140 = dma.hbm_to_vmem [thread:$0]  %s133, 2048, %s135, %s124, 64, 64, 4
        $region24: #{tpu_custom_call.1} parent=19 // pred_fallthru
          _
      $region20: #{tpu_custom_call.1} parent=5 // pred_fallthru
        _
      %p141 = scmp.le.s32.totalorder 1, %s15
      %p142 = scmp.lt.s32.totalorder %s15, 3
      %p143 = pnand %p141, %p142
      %p144 = pneg %p143
      // Predicated region
      $region25: #{tpu_custom_call.1} parent=5 // pred_check
        _
      $region26: #{tpu_custom_call.1} parent=5 // pred_check_branch
        %146 = sbr.rel (%p143) target = $region28
      $region27: #{tpu_custom_call.1} parent=5 // pred_region
        %s147 = ssub.s32 %s15, 1
        %s148 = sand.u32 %s28, 1
        %s149 = scalar_lea.sflag [#allocation3], %s148
        %s150 = sand.u32 %s28, 1
        %s151 = smul.addr %s150, 128
        %s152 = scalar_lea.vmem [#allocation2], %s151
        // Predicated region
        $region29: #{tpu_custom_call.1} parent=27 // pred_check
          %p153 = pneg %p41
        $region30: #{tpu_custom_call.1} parent=27 // pred_check_branch
          %155 = sbr.rel (%p153) target = $region32
        $region31: #{tpu_custom_call.1} parent=27 // pred_region
          %156 = dma.done %s149, 2048
        $region32: #{tpu_custom_call.1} parent=27 // pred_fallthru
          _
        // Predicated region
        $region33: #{tpu_custom_call.1} parent=27 // pred_check
          %p157 = pneg %p62
        $region34: #{tpu_custom_call.1} parent=27 // pred_check_branch
          %159 = sbr.rel (%p157) target = $region36
        $region35: #{tpu_custom_call.1} parent=27 // pred_region
          %160 = dma.done [#allocation6], 1024
        $region36: #{tpu_custom_call.1} parent=27 // pred_fallthru
          _
        %s161 = sand.u32 %s28, 1
        %s162 = scalar_lea.sflag [#allocation3], %s161
        %s163 = sand.u32 %s28, 1
        %s164 = smul.addr %s163, 128
        %s165 = scalar_lea.vmem [#allocation2], %s164
        %p166 = pneg %p41
        %p167 = pneg %p38
        %p168 = pneg %p62
        %p169 = pneg %p59
        %p170 = pneg %p88
        %p171 = pneg %p85
        %s172 = sand.u32 %s75, 1
        %s173 = scalar_lea.sflag [#allocation4], %s172
        %s174 = sand.u32 %s75, 1
        %s175 = smul.addr %s174, 128
        %s176 = scalar_lea.vmem [#allocation7], %s175
        %s177 = smul.u32 32, %s20
        %s178 = smul.u32 32, %s20
        %v180 = vld [vmem:[%s152] sm:$0xf]
        %v181 = vld [vmem:[%s152 + $0x4] sm:$0xf]
        %v182 = vld [vmem:[%s152 + $0x8] sm:$0xf]
        %v183 = vld [vmem:[%s152 + $0xc] sm:$0xf]
        %v184 = vld [vmem:[%s152 + $0x10] sm:$0xf]
        %v185 = vld [vmem:[%s152 + $0x14] sm:$0xf]
        %v186 = vld [vmem:[%s152 + $0x18] sm:$0xf]
        %v187 = vld [vmem:[%s152 + $0x1c] sm:$0xf]
        %v188 = vld [vmem:[%s152 + $0x20] sm:$0xf]
        %v189 = vld [vmem:[%s152 + $0x24] sm:$0xf]
        %v190 = vld [vmem:[%s152 + $0x28] sm:$0xf]
        %v191 = vld [vmem:[%s152 + $0x2c] sm:$0xf]
        %v192 = vld [vmem:[%s152 + $0x30] sm:$0xf]
        %v193 = vld [vmem:[%s152 + $0x34] sm:$0xf]
        %v194 = vld [vmem:[%s152 + $0x38] sm:$0xf]
        %v195 = vld [vmem:[%s152 + $0x3c] sm:$0xf]
        %v196 = vld [vmem:[%s152 + $0x40] sm:$0xf]
        %v197 = vld [vmem:[%s152 + $0x44] sm:$0xf]
        %v198 = vld [vmem:[%s152 + $0x48] sm:$0xf]
        %v199 = vld [vmem:[%s152 + $0x4c] sm:$0xf]
        %v200 = vld [vmem:[%s152 + $0x50] sm:$0xf]
        %v201 = vld [vmem:[%s152 + $0x54] sm:$0xf]
        %v202 = vld [vmem:[%s152 + $0x58] sm:$0xf]
        %v203 = vld [vmem:[%s152 + $0x5c] sm:$0xf]
        %v204 = vld [vmem:[%s152 + $0x60] sm:$0xf]
        %v205 = vld [vmem:[%s152 + $0x64] sm:$0xf]
        %v206 = vld [vmem:[%s152 + $0x68] sm:$0xf]
        %v207 = vld [vmem:[%s152 + $0x6c] sm:$0xf]
        %v208 = vld [vmem:[%s152 + $0x70] sm:$0xf]
        %v209 = vld [vmem:[%s152 + $0x74] sm:$0xf]
        %v210 = vld [vmem:[%s152 + $0x78] sm:$0xf]
        %v211 = vld [vmem:[%s152 + $0x7c] sm:$0xf]
        %v212 = vld [vmem:[#allocation5] sm:$0xf]
        %v213 = vld [vmem:[#allocation5 + $0x4] sm:$0xf]
        %v214 = vld [vmem:[#allocation5 + $0x8] sm:$0xf]
        %v215 = vld [vmem:[#allocation5 + $0xc] sm:$0xf]
        %v216 = vld [vmem:[#allocation5 + $0x10] sm:$0xf]
        %v217 = vld [vmem:[#allocation5 + $0x14] sm:$0xf]
        %v218 = vld [vmem:[#allocation5 + $0x18] sm:$0xf]
        %v219 = vld [vmem:[#allocation5 + $0x1c] sm:$0xf]
        %v220 = vld [vmem:[#allocation5 + $0x20] sm:$0xf]
        %v221 = vld [vmem:[#allocation5 + $0x24] sm:$0xf]
        %v222 = vld [vmem:[#allocation5 + $0x28] sm:$0xf]
        %v223 = vld [vmem:[#allocation5 + $0x2c] sm:$0xf]
        %v224 = vld [vmem:[#allocation5 + $0x30] sm:$0xf]
        %v225 = vld [vmem:[#allocation5 + $0x34] sm:$0xf]
        %v226 = vld [vmem:[#allocation5 + $0x38] sm:$0xf]
        %v227 = vld [vmem:[#allocation5 + $0x3c] sm:$0xf]
        %v260 = vunpack.c.l.b16 %v180
        %v261 = vunpack.c.l.b16 %v181
        %v262 = vunpack.c.l.b16 %v182
        %v263 = vunpack.c.l.b16 %v183
        %v264 = vunpack.c.l.b16 %v184
        %v265 = vunpack.c.l.b16 %v185
        %v266 = vunpack.c.l.b16 %v186
        %v267 = vunpack.c.l.b16 %v187
        %v268 = vunpack.c.l.b16 %v188
        %v269 = vunpack.c.l.b16 %v189
        %v270 = vunpack.c.l.b16 %v190
        %v271 = vunpack.c.l.b16 %v191
        %v272 = vunpack.c.l.b16 %v192
        %v273 = vunpack.c.l.b16 %v193
        %v274 = vunpack.c.l.b16 %v194
        %v275 = vunpack.c.l.b16 %v195
        %v276 = vunpack.c.l.b16 %v196
        %v277 = vunpack.c.l.b16 %v197
        %v278 = vunpack.c.l.b16 %v198
        %v279 = vunpack.c.l.b16 %v199
        %v280 = vunpack.c.l.b16 %v200
        %v281 = vunpack.c.l.b16 %v201
        %v282 = vunpack.c.l.b16 %v202
        %v283 = vunpack.c.l.b16 %v203
        %v284 = vunpack.c.l.b16 %v204
        %v285 = vunpack.c.l.b16 %v205
        %v286 = vunpack.c.l.b16 %v206
        %v287 = vunpack.c.l.b16 %v207
        %v288 = vunpack.c.l.b16 %v208
        %v289 = vunpack.c.l.b16 %v209
        %v290 = vunpack.c.l.b16 %v210
        %v291 = vunpack.c.l.b16 %v211
        %v292 = vpack.c.b16 %v261, %v260
        %v293 = vpack.c.b16 %v263, %v262
        %v294 = vpack.c.b16 %v265, %v264
        %v295 = vpack.c.b16 %v267, %v266
        %v296 = vpack.c.b16 %v269, %v268
        %v297 = vpack.c.b16 %v271, %v270
        %v298 = vpack.c.b16 %v273, %v272
        %v299 = vpack.c.b16 %v275, %v274
        %v300 = vpack.c.b16 %v277, %v276
        %v301 = vpack.c.b16 %v279, %v278
        %v302 = vpack.c.b16 %v281, %v280
        %v303 = vpack.c.b16 %v283, %v282
        %v304 = vpack.c.b16 %v285, %v284
        %v305 = vpack.c.b16 %v287, %v286
        %v306 = vpack.c.b16 %v289, %v288
        %v307 = vpack.c.b16 %v291, %v290
        %v340 = vunpack.c.l.b16 %v212
        %v341 = vunpack.c.l.b16 %v213
        %v342 = vunpack.c.l.b16 %v214
        %v343 = vunpack.c.l.b16 %v215
        %v344 = vunpack.c.l.b16 %v216
        %v345 = vunpack.c.l.b16 %v217
        %v346 = vunpack.c.l.b16 %v218
        %v347 = vunpack.c.l.b16 %v219
        %v348 = vunpack.c.l.b16 %v220
        %v349 = vunpack.c.l.b16 %v221
        %v350 = vunpack.c.l.b16 %v222
        %v351 = vunpack.c.l.b16 %v223
        %v352 = vunpack.c.l.b16 %v224
        %v353 = vunpack.c.l.b16 %v225
        %v354 = vunpack.c.l.b16 %v226
        %v355 = vunpack.c.l.b16 %v227
        %v356 = vpack.c.b16 %v341, %v340
        %v357 = vpack.c.b16 %v343, %v342
        %v358 = vpack.c.b16 %v345, %v344
        %v359 = vpack.c.b16 %v347, %v346
        %v360 = vpack.c.b16 %v349, %v348
        %v361 = vpack.c.b16 %v351, %v350
        %v362 = vpack.c.b16 %v353, %v352
        %v363 = vpack.c.b16 %v355, %v354
        %372 = vmatprep.subr.bf16.mxu0 0
        %373 = vmatpush1.bf16.msra.mxu0 %v363
        %374 = vmatprep.subr.bf16.mxu0 0
        %375 = vmatpush1.bf16.msra.mxu0 %v362
        %376 = vmatprep.subr.bf16.mxu0 0
        %377 = vmatpush1.bf16.msra.mxu0 %v361
        %378 = vmatprep.subr.bf16.mxu0 0
        %379 = vmatpush1.bf16.msra.mxu0 %v360
        %380 = vmatprep.subr.bf16.mxu0 0
        %381 = vmatpush1.bf16.msra.mxu0 %v359
        %382 = vmatprep.subr.bf16.mxu0 0
        %383 = vmatpush1.bf16.msra.mxu0 %v358
        %384 = vmatprep.subr.bf16.mxu0 0
        %385 = vmatpush1.bf16.msra.mxu0 %v357
        %386 = vmatprep.subr.bf16.mxu0 0
        %387 = vmatpush1.bf16.msra.mxu0 %v356
        %388 = vmatprep.subr.bf16.mxu0 0
        %389 = vmatpush2.bf16.msra.mxu0 0
        %390 = vmatprep.subr.bf16.mxu0 0
        %391 = vmatpush2.bf16.msra.mxu0 0
        %392 = vmatprep.subr.bf16.mxu0 0
        %393 = vmatpush2.bf16.msra.mxu0 0
        %394 = vmatprep.subr.bf16.mxu0 0
        %395 = vmatpush2.bf16.msra.mxu0 0
        %396 = vmatprep.subr.bf16.mxu0 0
        %397 = vmatpush2.bf16.msra.mxu0 0
        %398 = vmatprep.subr.bf16.mxu0 0
        %399 = vmatpush2.bf16.msra.mxu0 0
        %400 = vmatprep.subr.bf16.mxu0 0
        %401 = vmatpush2.bf16.msra.mxu0 0
        %402 = vmatprep.subr.bf16.mxu0 0
        %403 = vmatpush2.bf16.msra.mxu0 0
        %404 = vmatprep.mubr.bf16.mxu0 0
        %405 = vmatmul.mubr.bf16.gmra.mxu0 %v292
        %v406 = vpop.f32.mrf.mxu0
        %v407 = vadd.f32 0.0, %v406
        %v408 = vpop.f32.mrf.mxu0
        %v409 = vpop.f32.mrf.mxu0
        %v410 = vadd.f32 0.0, %v409
        %v411 = vpop.f32.mrf.mxu0
        %412 = vmatprep.mubr.bf16.mxu0 0
        %413 = vmatmul.mubr.bf16.gmra.mxu0 %v293
        %v414 = vpop.f32.mrf.mxu0
        %v415 = vadd.f32 0.0, %v414
        %v416 = vpop.f32.mrf.mxu0
        %v417 = vpop.f32.mrf.mxu0
        %v418 = vadd.f32 0.0, %v417
        %v419 = vpop.f32.mrf.mxu0
        %420 = vmatprep.mubr.bf16.mxu0 0
        %421 = vmatmul.mubr.bf16.gmra.mxu0 %v294
        %v422 = vpop.f32.mrf.mxu0
        %v423 = vadd.f32 0.0, %v422
        %v424 = vpop.f32.mrf.mxu0
        %v425 = vpop.f32.mrf.mxu0
        %v426 = vadd.f32 0.0, %v425
        %v427 = vpop.f32.mrf.mxu0
        %428 = vmatprep.mubr.bf16.mxu0 0
        %429 = vmatmul.mubr.bf16.gmra.mxu0 %v295
        %v430 = vpop.f32.mrf.mxu0
        %v431 = vadd.f32 0.0, %v430
        %v432 = vpop.f32.mrf.mxu0
        %v433 = vpop.f32.mrf.mxu0
        %v434 = vadd.f32 0.0, %v433
        %v435 = vpop.f32.mrf.mxu0
        %436 = vmatprep.mubr.bf16.mxu0 0
        %437 = vmatmul.mubr.bf16.gmra.mxu0 %v296
        %v438 = vpop.f32.mrf.mxu0
        %v439 = vadd.f32 0.0, %v438
        %v440 = vpop.f32.mrf.mxu0
        %v441 = vpop.f32.mrf.mxu0
        %v442 = vadd.f32 0.0, %v441
        %v443 = vpop.f32.mrf.mxu0
        %444 = vmatprep.mubr.bf16.mxu0 0
        %445 = vmatmul.mubr.bf16.gmra.mxu0 %v297
        %v446 = vpop.f32.mrf.mxu0
        %v447 = vadd.f32 0.0, %v446
        %v448 = vpop.f32.mrf.mxu0
        %v449 = vpop.f32.mrf.mxu0
        %v450 = vadd.f32 0.0, %v449
        %v451 = vpop.f32.mrf.mxu0
        %452 = vmatprep.mubr.bf16.mxu0 0
        %453 = vmatmul.mubr.bf16.gmra.mxu0 %v298
        %v454 = vpop.f32.mrf.mxu0
        %v455 = vadd.f32 0.0, %v454
        %v456 = vpop.f32.mrf.mxu0
        %v457 = vpop.f32.mrf.mxu0
        %v458 = vadd.f32 0.0, %v457
        %v459 = vpop.f32.mrf.mxu0
        %460 = vmatprep.mubr.bf16.mxu0 0
        %461 = vmatmul.mubr.bf16.gmra.mxu0 %v299
        %v462 = vpop.f32.mrf.mxu0
        %v463 = vadd.f32 0.0, %v462
        %v464 = vpop.f32.mrf.mxu0
        %v465 = vpop.f32.mrf.mxu0
        %v466 = vadd.f32 0.0, %v465
        %v467 = vpop.f32.mrf.mxu0
        %468 = vmatprep.mubr.bf16.mxu0 0
        %469 = vmatmul.mubr.bf16.gmra.mxu0 %v300
        %v470 = vpop.f32.mrf.mxu0
        %v471 = vadd.f32 0.0, %v470
        %v472 = vpop.f32.mrf.mxu0
        %v473 = vpop.f32.mrf.mxu0
        %v474 = vadd.f32 0.0, %v473
        %v475 = vpop.f32.mrf.mxu0
        %476 = vmatprep.mubr.bf16.mxu0 0
        %477 = vmatmul.mubr.bf16.gmra.mxu0 %v301
        %v478 = vpop.f32.mrf.mxu0
        %v479 = vadd.f32 0.0, %v478
        %v480 = vpop.f32.mrf.mxu0
        %v481 = vpop.f32.mrf.mxu0
        %v482 = vadd.f32 0.0, %v481
        %v483 = vpop.f32.mrf.mxu0
        %484 = vmatprep.mubr.bf16.mxu0 0
        %485 = vmatmul.mubr.bf16.gmra.mxu0 %v302
        %v486 = vpop.f32.mrf.mxu0
        %v487 = vadd.f32 0.0, %v486
        %v488 = vpop.f32.mrf.mxu0
        %v489 = vpop.f32.mrf.mxu0
        %v490 = vadd.f32 0.0, %v489
        %v491 = vpop.f32.mrf.mxu0
        %492 = vmatprep.mubr.bf16.mxu0 0
        %493 = vmatmul.mubr.bf16.gmra.mxu0 %v303
        %v494 = vpop.f32.mrf.mxu0
        %v495 = vadd.f32 0.0, %v494
        %v496 = vpop.f32.mrf.mxu0
        %v497 = vpop.f32.mrf.mxu0
        %v498 = vadd.f32 0.0, %v497
        %v499 = vpop.f32.mrf.mxu0
        %500 = vmatprep.mubr.bf16.mxu0 0
        %501 = vmatmul.mubr.bf16.gmra.mxu0 %v304
        %v502 = vpop.f32.mrf.mxu0
        %v503 = vadd.f32 0.0, %v502
        %v504 = vpop.f32.mrf.mxu0
        %v505 = vpop.f32.mrf.mxu0
        %v506 = vadd.f32 0.0, %v505
        %v507 = vpop.f32.mrf.mxu0
        %508 = vmatprep.mubr.bf16.mxu0 0
        %509 = vmatmul.mubr.bf16.gmra.mxu0 %v305
        %v510 = vpop.f32.mrf.mxu0
        %v511 = vadd.f32 0.0, %v510
        %v512 = vpop.f32.mrf.mxu0
        %v513 = vpop.f32.mrf.mxu0
        %v514 = vadd.f32 0.0, %v513
        %v515 = vpop.f32.mrf.mxu0
        %516 = vmatprep.mubr.bf16.mxu0 0
        %517 = vmatmul.mubr.bf16.gmra.mxu0 %v306
        %v518 = vpop.f32.mrf.mxu0
        %v519 = vadd.f32 0.0, %v518
        %v520 = vpop.f32.mrf.mxu0
        %v521 = vpop.f32.mrf.mxu0
        %v522 = vadd.f32 0.0, %v521
        %v523 = vpop.f32.mrf.mxu0
        %524 = vmatprep.mubr.bf16.mxu0 0
        %525 = vmatmul.mubr.bf16.gmra.mxu0 %v307
        %v526 = vpop.f32.mrf.mxu0
        %v527 = vadd.f32 0.0, %v526
        %v528 = vpop.f32.mrf.mxu0
        %v529 = vpop.f32.mrf.mxu0
        %v530 = vadd.f32 0.0, %v529
        %v531 = vpop.f32.mrf.mxu0
        %532 = vdwg.mxu0
        %v533 = vpack.c.bf16 %v410, %v407
        %v534 = vpack.c.bf16 %v418, %v415
        %v535 = vpack.c.bf16 %v426, %v423
        %v536 = vpack.c.bf16 %v434, %v431
        %v537 = vpack.c.bf16 %v442, %v439
        %v538 = vpack.c.bf16 %v450, %v447
        %v539 = vpack.c.bf16 %v458, %v455
        %v540 = vpack.c.bf16 %v466, %v463
        %v541 = vpack.c.bf16 %v474, %v471
        %v542 = vpack.c.bf16 %v482, %v479
        %v543 = vpack.c.bf16 %v490, %v487
        %v544 = vpack.c.bf16 %v498, %v495
        %v545 = vpack.c.bf16 %v506, %v503
        %v546 = vpack.c.bf16 %v514, %v511
        %v547 = vpack.c.bf16 %v522, %v519
        %v548 = vpack.c.bf16 %v530, %v527
        %v565 = vunpack.c.l.b16 %v533
        %v566 = vunpack.c.h.b16 %v533
        %v567 = vunpack.c.l.b16 %v534
        %v568 = vunpack.c.h.b16 %v534
        %v569 = vunpack.c.l.b16 %v535
        %v570 = vunpack.c.h.b16 %v535
        %v571 = vunpack.c.l.b16 %v536
        %v572 = vunpack.c.h.b16 %v536
        %v573 = vunpack.c.l.b16 %v537
        %v574 = vunpack.c.h.b16 %v537
        %v575 = vunpack.c.l.b16 %v538
        %v576 = vunpack.c.h.b16 %v538
        %v577 = vunpack.c.l.b16 %v539
        %v578 = vunpack.c.h.b16 %v539
        %v579 = vunpack.c.l.b16 %v540
        %v580 = vunpack.c.h.b16 %v540
        %v581 = vunpack.c.l.b16 %v541
        %v582 = vunpack.c.h.b16 %v541
        %v583 = vunpack.c.l.b16 %v542
        %v584 = vunpack.c.h.b16 %v542
        %v585 = vunpack.c.l.b16 %v543
        %v586 = vunpack.c.h.b16 %v543
        %v587 = vunpack.c.l.b16 %v544
        %v588 = vunpack.c.h.b16 %v544
        %v589 = vunpack.c.l.b16 %v545
        %v590 = vunpack.c.h.b16 %v545
        %v591 = vunpack.c.l.b16 %v546
        %v592 = vunpack.c.h.b16 %v546
        %v593 = vunpack.c.l.b16 %v547
        %v594 = vunpack.c.h.b16 %v547
        %v595 = vunpack.c.l.b16 %v548
        %v596 = vunpack.c.h.b16 %v548
        %v597 = vpack.c.b16 %v565, %v565
        %v598 = vpack.c.b16 %v566, %v566
        %v599 = vpack.c.b16 %v567, %v567
        %v600 = vpack.c.b16 %v568, %v568
        %v601 = vpack.c.b16 %v569, %v569
        %v602 = vpack.c.b16 %v570, %v570
        %v603 = vpack.c.b16 %v571, %v571
        %v604 = vpack.c.b16 %v572, %v572
        %v605 = vpack.c.b16 %v573, %v573
        %v606 = vpack.c.b16 %v574, %v574
        %v607 = vpack.c.b16 %v575, %v575
        %v608 = vpack.c.b16 %v576, %v576
        %v609 = vpack.c.b16 %v577, %v577
        %v610 = vpack.c.b16 %v578, %v578
        %v611 = vpack.c.b16 %v579, %v579
        %v612 = vpack.c.b16 %v580, %v580
        %v613 = vpack.c.b16 %v581, %v581
        %v614 = vpack.c.b16 %v582, %v582
        %v615 = vpack.c.b16 %v583, %v583
        %v616 = vpack.c.b16 %v584, %v584
        %v617 = vpack.c.b16 %v585, %v585
        %v618 = vpack.c.b16 %v586, %v586
        %v619 = vpack.c.b16 %v587, %v587
        %v620 = vpack.c.b16 %v588, %v588
        %v621 = vpack.c.b16 %v589, %v589
        %v622 = vpack.c.b16 %v590, %v590
        %v623 = vpack.c.b16 %v591, %v591
        %v624 = vpack.c.b16 %v592, %v592
        %v625 = vpack.c.b16 %v593, %v593
        %v626 = vpack.c.b16 %v594, %v594
        %v627 = vpack.c.b16 %v595, %v595
        %v628 = vpack.c.b16 %v596, %v596
        %661 = vst [vmem:[%s176] sm:$0xf] %v597
        %662 = vst [vmem:[%s176 + $0x4] sm:$0xf] %v598
        %663 = vst [vmem:[%s176 + $0x8] sm:$0xf] %v599
        %664 = vst [vmem:[%s176 + $0xc] sm:$0xf] %v600
        %665 = vst [vmem:[%s176 + $0x10] sm:$0xf] %v601
        %666 = vst [vmem:[%s176 + $0x14] sm:$0xf] %v602
        %667 = vst [vmem:[%s176 + $0x18] sm:$0xf] %v603
        %668 = vst [vmem:[%s176 + $0x1c] sm:$0xf] %v604
        %669 = vst [vmem:[%s176 + $0x20] sm:$0xf] %v605
        %670 = vst [vmem:[%s176 + $0x24] sm:$0xf] %v606
        %671 = vst [vmem:[%s176 + $0x28] sm:$0xf] %v607
        %672 = vst [vmem:[%s176 + $0x2c] sm:$0xf] %v608
        %673 = vst [vmem:[%s176 + $0x30] sm:$0xf] %v609
        %674 = vst [vmem:[%s176 + $0x34] sm:$0xf] %v610
        %675 = vst [vmem:[%s176 + $0x38] sm:$0xf] %v611
        %676 = vst [vmem:[%s176 + $0x3c] sm:$0xf] %v612
        %677 = vst [vmem:[%s176 + $0x40] sm:$0xf] %v613
        %678 = vst [vmem:[%s176 + $0x44] sm:$0xf] %v614
        %679 = vst [vmem:[%s176 + $0x48] sm:$0xf] %v615
        %680 = vst [vmem:[%s176 + $0x4c] sm:$0xf] %v616
        %681 = vst [vmem:[%s176 + $0x50] sm:$0xf] %v617
        %682 = vst [vmem:[%s176 + $0x54] sm:$0xf] %v618
        %683 = vst [vmem:[%s176 + $0x58] sm:$0xf] %v619
        %684 = vst [vmem:[%s176 + $0x5c] sm:$0xf] %v620
        %685 = vst [vmem:[%s176 + $0x60] sm:$0xf] %v621
        %686 = vst [vmem:[%s176 + $0x64] sm:$0xf] %v622
        %687 = vst [vmem:[%s176 + $0x68] sm:$0xf] %v623
        %688 = vst [vmem:[%s176 + $0x6c] sm:$0xf] %v624
        %689 = vst [vmem:[%s176 + $0x70] sm:$0xf] %v625
        %690 = vst [vmem:[%s176 + $0x74] sm:$0xf] %v626
        %691 = vst [vmem:[%s176 + $0x78] sm:$0xf] %v627
        %692 = vst [vmem:[%s176 + $0x7c] sm:$0xf] %v628
        %s693 = sand.u32 %s75, 1
        %s694 = scalar_lea.sflag [#allocation4], %s693
        %s695 = sand.u32 %s75, 1
        %s696 = smul.addr %s695, 128
        %s697 = scalar_lea.vmem [#allocation7], %s696
        // Predicated region
        $region37: #{tpu_custom_call.1} parent=27 // pred_check
          %p698 = pneg %p85
        $region38: #{tpu_custom_call.1} parent=27 // pred_check_branch
          %700 = sbr.rel (%p698) target = $region40
        $region39: #{tpu_custom_call.1} parent=27 // pred_region
          %s701 = smul.u32 32, %s20
          %s703 = ssub.s32 2048, 2048
          %704 = vsyncadd %s694, %s703
          %s705 = smul.addr %s701, 64
          %s706 = scalar_lea.hbm %s2, %s705
          %s707 = sshll.u32 %s697, 4
          %s708 = int_to_ptr.vmem [resolvable:$true] %s707
          %713 = dma.vmem_to_hbm [thread:$0]  %s708, 2048, %s706, %s694, 64, 64, 4
        $region40: #{tpu_custom_call.1} parent=27 // pred_fallthru
          _
      $region28: #{tpu_custom_call.1} parent=5 // pred_fallthru
        _
      %p714 = scmp.le.s32.totalorder 2, %s15
      // Predicated region
      $region41: #{tpu_custom_call.1} parent=5 // pred_check
        %p715 = pneg %p714
      $region42: #{tpu_custom_call.1} parent=5 // pred_check_branch
        %717 = sbr.rel (%p715) target = $region44
      $region43: #{tpu_custom_call.1} parent=5 // pred_region
        %s718 = ssub.s32 %s15, 2
        // Predicated region
        $region45: #{tpu_custom_call.1} parent=43 // pred_check
          %p719 = pneg %p91
        $region46: #{tpu_custom_call.1} parent=43 // pred_check_branch
          %721 = sbr.rel (%p719) target = $region48
        $region47: #{tpu_custom_call.1} parent=43 // pred_region
          %s722 = sand.u32 %s76, 1
          %s723 = scalar_lea.sflag [#allocation4], %s722
          %s724 = sand.u32 %s76, 1
          %s725 = smul.addr %s724, 128
          %s726 = scalar_lea.vmem [#allocation7], %s725
          %727 = dma.done %s723, 2048
        $region48: #{tpu_custom_call.1} parent=43 // pred_fallthru
          _
      $region44: #{tpu_custom_call.1} parent=5 // pred_fallthru
        _
    $region6: #{tpu_custom_call.1} parent=1 // loop_footer
      %s19 = sadd.s32 1, %s15
    $region7: #{tpu_custom_call.1} parent=1 // loop_footer_branch
      %14 = sbr.rel target = $region3
    $region8: #{tpu_custom_call.1} parent=1 // loop_exit
      _
    %728 = vsyncpa [#allocation3], 1
    %s729 = scalar_lea.sflag [#allocation3], 1
    %730 = vsyncpa %s729, 1
    %731 = vsyncpa [#allocation6], 1
    %732 = vsyncpa [#allocation4], 1
    %s733 = scalar_lea.sflag [#allocation4], 1
    %734 = vsyncpa %s733, 1

</llo_original>
